<compile_context>
chip_gen: v6e
topology: v6e:2x2x1
jax: 0.10.0
libtpu: 0.0.40
codegen_flags: <defaults>
</compile_context>

<pallas_src>
import functools

import jax
import jax.numpy as jnp
import numpy as np
from jax.experimental import pallas as pl
from jax.experimental.pallas import tpu as pltpu


def _round_up(x: int, m: int) -> int:
    return (x + m - 1) // m * m


def _choose_chunk(T: int, max_chunk: int = 64) -> int:
    """Largest divisor of T that is <= max_chunk (so blocks tile T exactly)."""
    ct = min(T, max_chunk)
    while T % ct:
        ct -= 1
    return ct


def _rnn_net_kernel(x_ref, h0_ref, wih_ref, whh_ref, b_ref, wo_ref, bo_ref,
                    y_ref, out_ref, h_scratch, xw_scratch,
                    *, chunk_t: int, batch_p: int, unroll):
    c = pl.program_id(0)

    # Seed the carried hidden state from h0 on the first chunk only.
    @pl.when(c == 0)
    def _():
        h_scratch[...] = h0_ref[...]

    # ---- Phase 1 (batched): input projection for the whole chunk, one GEMM ----
    # x block: (chunk_t * batch_p, I)  @  (I, Hp)  + bias
    xw_scratch[...] = (
        jnp.dot(x_ref[...], wih_ref[...], preferred_element_type=jnp.float32)
        + b_ref[...])

    whh = whh_ref[...]  # (Hp, Hp), kept in vregs across the serial loop

    # ---- Phase 2 (serial): the recurrence ----
    def step(t, h):
        r0 = pl.multiple_of(t * batch_p, batch_p)
        h_new = jnp.maximum(
            xw_scratch[pl.ds(r0, batch_p), :]
            + jnp.dot(h, whh, preferred_element_type=jnp.float32),
            0.0)
        out_ref[pl.ds(r0, batch_p), :] = h_new.astype(out_ref.dtype)
        return h_new

    h_last = jax.lax.fori_loop(0, chunk_t, step, h_scratch[...], unroll=unroll)
    h_scratch[...] = h_last

    # ---- Phase 3 (batched): output linear over the whole chunk, one GEMM ----
    y_ref[...] = (
        jnp.dot(out_ref[...], wo_ref[...], preferred_element_type=jnp.float32)
        + bo_ref[...]).astype(y_ref.dtype)


def net_forward(x, h0, params):
    """x: (T, B, I) f32, h0: (1, B, H) f32. Returns (y=(T,B,O), out=(T,B,H))."""
    T, B, I = x.shape
    H = params["w_hh_t"].shape[0]
    O = params["w_out_t"].shape[1]

    # Padded (lane/sublane-dense) dimensions.
    Bp = max(_round_up(B, 8), 8)
    Hp = _round_up(H, 128)
    Op = _round_up(O, 128)

    # Zero-pad weights / biases (padding rows & cols are zero => real outputs exact).
    wih = jnp.zeros((I, Hp), jnp.float32).at[:, :H].set(params["w_ih_t"])
    whh = jnp.zeros((Hp, Hp), jnp.float32).at[:H, :H].set(params["w_hh_t"])
    b = jnp.zeros((1, Hp), jnp.float32).at[0, :H].set(params["b_ih"] + params["b_hh"])
    wo = jnp.zeros((Hp, Op), jnp.float32).at[:H, :O].set(params["w_out_t"])
    bo = jnp.zeros((1, Op), jnp.float32).at[0, :O].set(params["b_out"])

    # Pad inputs and pack (T, B) into the row dimension -> all kernel buffers are 2-D.
    x_p = jnp.zeros((T, Bp, I), jnp.float32).at[:, :B, :].set(x)
    x2 = x_p.reshape(T * Bp, I)
    h0_p = jnp.zeros((Bp, Hp), jnp.float32).at[:B, :H].set(h0[0])

    CT = _choose_chunk(T)                       # time steps per grid step
    rows = CT * Bp                              # rows per block
    unroll = True if CT <= 16 else 8

    kernel = functools.partial(_rnn_net_kernel, chunk_t=CT, batch_p=Bp, unroll=unroll)

    grid_spec = pltpu.PrefetchScalarGridSpec(
        num_scalar_prefetch=0,
        grid=(T // CT,),
        in_specs=[
            pl.BlockSpec((rows, I), lambda c: (c, 0)),    # x (packed rows)
            pl.BlockSpec((Bp, Hp), lambda c: (0, 0)),     # h0
            pl.BlockSpec((I, Hp), lambda c: (0, 0)),      # W_ih^T (padded)
            pl.BlockSpec((Hp, Hp), lambda c: (0, 0)),     # W_hh^T (padded)
            pl.BlockSpec((1, Hp), lambda c: (0, 0)),      # b_ih + b_hh
            pl.BlockSpec((Hp, Op), lambda c: (0, 0)),     # W_out^T (padded)
            pl.BlockSpec((1, Op), lambda c: (0, 0)),      # b_out
        ],
        out_specs=[
            pl.BlockSpec((rows, Op), lambda c: (c, 0)),   # y (packed rows)
            pl.BlockSpec((rows, Hp), lambda c: (c, 0)),   # out / hidden states
        ],
        scratch_shapes=[
            pltpu.VMEM((Bp, Hp), jnp.float32),            # carried hidden state
            pltpu.VMEM((rows, Hp), jnp.float32),          # xw for the current chunk
        ],
    )

    y2, out2 = pl.pallas_call(
        kernel,
        out_shape=(
            jax.ShapeDtypeStruct((T * Bp, Op), jnp.float32),
            jax.ShapeDtypeStruct((T * Bp, Hp), jnp.float32),
        ),
        grid_spec=grid_spec,
        compiler_params=pltpu.CompilerParams(
            dimension_semantics=("arbitrary",),   # time-chunk axis is a true recurrence
        ),
    )(x2, h0_p, wih, whh, b, wo, bo)

    # Unpack rows and strip padding.
    y = y2.reshape(T, Bp, Op)[:, :B, :O]
    out = out2.reshape(T, Bp, Hp)[:, :B, :H]
    return y, out


def _reference_forward(x, h0, params):
    """Pure-JAX reference (lax.scan) mirroring torch.nn.RNN(relu) + Linear semantics."""
    wih_t = params["w_ih_t"]
    whh_t = params["w_hh_t"]
    b = params["b_ih"] + params["b_hh"]

    def step(h, x_t):
        h_new = jnp.maximum(x_t @ wih_t + h @ whh_t + b, 0.0)
        return h_new, h_new

    _, out = jax.lax.scan(step, h0[0], x)
    y = out @ params["w_out_t"] + params["b_out"]
    return y, out


def init_params(key, input_size, hidden_size, output_size):
    """Deterministic init mimicking PyTorch's U(-1/sqrt(H), 1/sqrt(H)) scheme."""
    k = jax.random.split(key, 6)
    s = 1.0 / np.sqrt(hidden_size)
    return {
        "w_ih_t": jax.random.uniform(k[0], (input_size, hidden_size), jnp.float32, -s, s),
        "w_hh_t": jax.random.uniform(k[1], (hidden_size, hidden_size), jnp.float32, -s, s),
        "b_ih":   jax.random.uniform(k[2], (hidden_size,), jnp.float32, -s, s),
        "b_hh":   jax.random.uniform(k[3], (hidden_size,), jnp.float32, -s, s),
        "w_out_t": jax.random.uniform(k[4], (hidden_size, output_size), jnp.float32, -s, s),
        "b_out":  jax.random.uniform(k[5], (output_size,), jnp.float32, -s, s),
    }


if __name__ == "__main__":
    # Small shapes consistent with the module: (T, B, I) input, hidden H, output O.
    T, B, I, H, O = 8, 2, 4, 32, 3

    key = jax.random.PRNGKey(0)
    kx, kp = jax.random.split(key)
    x = jax.random.normal(kx, (T, B, I), dtype=jnp.float32)
    h0 = jnp.zeros((1, B, H), dtype=jnp.float32)   # default hidden (zeros)
    params = init_params(kp, I, H, O)

    y, out = net_forward(x, h0, params)
    y = jax.block_until_ready(y)
    out = jax.block_until_ready(out)

    y_ref, out_ref = _reference_forward(x, h0, params)
    np.testing.assert_allclose(np.asarray(out), np.asarray(out_ref), rtol=1e-5, atol=1e-5)
    np.testing.assert_allclose(np.asarray(y), np.asarray(y_ref), rtol=1e-5, atol=1e-5)

    print("KERNEL_OK")
</pallas_src>

<mosaic_0001>
module attributes {stable_mosaic.version = 11 : i64} {
  func.func @_rnn_net_kernel(%arg0: i32, %arg1: memref<64x4xf32, #tpu.memory_space<vmem>>, %arg2: memref<8x128xf32, #tpu.memory_space<vmem>>, %arg3: memref<4x128xf32, #tpu.memory_space<vmem>>, %arg4: memref<128x128xf32, #tpu.memory_space<vmem>>, %arg5: memref<1x128xf32, #tpu.memory_space<vmem>>, %arg6: memref<128x128xf32, #tpu.memory_space<vmem>>, %arg7: memref<1x128xf32, #tpu.memory_space<vmem>>, %arg8: memref<64x128xf32, #tpu.memory_space<vmem>>, %arg9: memref<64x128xf32, #tpu.memory_space<vmem>>, %arg10: memref<8x128xf32, #tpu.memory_space<vmem>>, %arg11: memref<64x128xf32, #tpu.memory_space<vmem>>) attributes {dimension_semantics = [#tpu.dimension_semantics<arbitrary>], iteration_bounds = array<i64: 1>, scalar_prefetch = 0 : i64, scratch_operands = 2 : i64, tpu.core_type = #tpu.core_type<tc>, window_params = [{transform_indices = @transform_0, window_bounds = array<i64: 64, 4>}, {pipeline_mode = #tpu.pipeline_mode<synchronous>, transform_indices = @transform_1, window_bounds = array<i64: 8, 128>}, {pipeline_mode = #tpu.pipeline_mode<synchronous>, transform_indices = @transform_2, window_bounds = array<i64: 4, 128>}, {pipeline_mode = #tpu.pipeline_mode<synchronous>, transform_indices = @transform_3, window_bounds = array<i64: 128, 128>}, {pipeline_mode = #tpu.pipeline_mode<synchronous>, transform_indices = @transform_4, window_bounds = array<i64: 1, 128>}, {pipeline_mode = #tpu.pipeline_mode<synchronous>, transform_indices = @transform_5, window_bounds = array<i64: 128, 128>}, {pipeline_mode = #tpu.pipeline_mode<synchronous>, transform_indices = @transform_6, window_bounds = array<i64: 1, 128>}, {transform_indices = @transform_7, window_bounds = array<i64: 64, 128>}, {transform_indices = @transform_8, window_bounds = array<i64: 64, 128>}]} {
    %c0_i32 = arith.constant 0 : i32
    %0 = arith.cmpi eq, %arg0, %c0_i32 : i32
    %1 = arith.extui %0 : i1 to i32
    %c0_i32_0 = arith.constant 0 : i32
    %2 = arith.cmpi ne, %1, %c0_i32_0 : i32
    scf.if %2 {
      %c0_64 = arith.constant 0 : index
      %c0_65 = arith.constant 0 : index
      %100 = vector.load %arg2[%c0_64, %c0_65] : memref<8x128xf32, #tpu.memory_space<vmem>>, vector<8x128xf32>
      %c0_66 = arith.constant 0 : index
      %c0_67 = arith.constant 0 : index
      %101 = vector.load %arg10[%c0_66, %c0_67] : memref<8x128xf32, #tpu.memory_space<vmem>>, vector<8x128xf32>
      tpu.vector_store %arg10[%c0_66, %c0_67], %100 {strides = array<i32>} : memref<8x128xf32, #tpu.memory_space<vmem>>, vector<8x128xf32>,
    } else {
    }
    %c0 = arith.constant 0 : index
    %c0_1 = arith.constant 0 : index
    %3 = vector.load %arg1[%c0, %c0_1] : memref<64x4xf32, #tpu.memory_space<vmem>>, vector<64x4xf32>
    %c0_2 = arith.constant 0 : index
    %c0_3 = arith.constant 0 : index
    %4 = vector.load %arg3[%c0_2, %c0_3] : memref<4x128xf32, #tpu.memory_space<vmem>>, vector<4x128xf32>
    %cst = arith.constant dense<0.000000e+00> : vector<64x128xf32>
    %5 = tpu.matmul %3, %4, %cst {dimension_numbers = #tpu.dot_dimension_numbers<[1], [0], [0], [1], [0, 0, 1, 1], [], []>} : vector<64x4xf32>, vector<4x128xf32>, vector<64x128xf32> -> vector<64x128xf32>
    %c0_4 = arith.constant 0 : index
    %c0_5 = arith.constant 0 : index
    %6 = vector.load %arg5[%c0_4, %c0_5] : memref<1x128xf32, #tpu.memory_space<vmem>>, vector<1x128xf32>
    %7 = vector.broadcast %6 : vector<1x128xf32> to vector<64x128xf32>
    %8 = arith.addf %5, %7 : vector<64x128xf32>
    %c0_6 = arith.constant 0 : index
    %c0_7 = arith.constant 0 : index
    %9 = vector.load %arg11[%c0_6, %c0_7] : memref<64x128xf32, #tpu.memory_space<vmem>>, vector<64x128xf32>
    tpu.vector_store %arg11[%c0_6, %c0_7], %8 {strides = array<i32>} : memref<64x128xf32, #tpu.memory_space<vmem>>, vector<64x128xf32>,
    %c0_8 = arith.constant 0 : index
    %c0_9 = arith.constant 0 : index
    %10 = vector.load %arg4[%c0_8, %c0_9] : memref<128x128xf32, #tpu.memory_space<vmem>>, vector<128x128xf32>
    %c0_10 = arith.constant 0 : index
    %c0_11 = arith.constant 0 : index
    %11 = vector.load %arg10[%c0_10, %c0_11] : memref<8x128xf32, #tpu.memory_space<vmem>>, vector<8x128xf32>
    %c0_i32_12 = arith.constant 0 : i32
    %c8_i32 = arith.constant 8 : i32
    %12 = arith.muli %c0_i32_12, %c8_i32 : i32
    %13 = tpu.assume_multiple %12, 8 : i32
    %14 = arith.index_cast %13 : i32 to index
    %c0_13 = arith.constant 0 : index
    %15 = vector.load %arg11[%14, %c0_13] : memref<64x128xf32, #tpu.memory_space<vmem>>, vector<8x128xf32>
    %cst_14 = arith.constant dense<0.000000e+00> : vector<8x128xf32>
    %16 = tpu.matmul %11, %10, %cst_14 {dimension_numbers = #tpu.dot_dimension_numbers<[1], [0], [0], [1], [0, 0, 1, 1], [], []>} : vector<8x128xf32>, vector<128x128xf32>, vector<8x128xf32> -> vector<8x128xf32>
    %17 = arith.addf %15, %16 : vector<8x128xf32>
    %cst_15 = arith.constant 0.000000e+00 : f32
    %18 = vector.broadcast %cst_15 : f32 to vector<8x128xf32>
    %19 = arith.maximumf %17, %18 : vector<8x128xf32>
    %20 = arith.index_cast %13 : i32 to index
    %c0_16 = arith.constant 0 : index
    %21 = vector.load %arg9[%20, %c0_16] : memref<64x128xf32, #tpu.memory_space<vmem>>, vector<8x128xf32>
    tpu.vector_store %arg9[%20, %c0_16], %19 {strides = array<i32>} : memref<64x128xf32, #tpu.memory_space<vmem>>, vector<8x128xf32>,
    %c1_i32 = arith.constant 1 : i32
    %c8_i32_17 = arith.constant 8 : i32
    %22 = arith.muli %c1_i32, %c8_i32_17 : i32
    %23 = tpu.assume_multiple %22, 8 : i32
    %24 = arith.index_cast %23 : i32 to index
    %c0_18 = arith.constant 0 : index
    %25 = vector.load %arg11[%24, %c0_18] : memref<64x128xf32, #tpu.memory_space<vmem>>, vector<8x128xf32>
    %cst_19 = arith.constant dense<0.000000e+00> : vector<8x128xf32>
    %26 = tpu.matmul %19, %10, %cst_19 {dimension_numbers = #tpu.dot_dimension_numbers<[1], [0], [0], [1], [0, 0, 1, 1], [], []>} : vector<8x128xf32>, vector<128x128xf32>, vector<8x128xf32> -> vector<8x128xf32>
    %27 = arith.addf %25, %26 : vector<8x128xf32>
    %cst_20 = arith.constant 0.000000e+00 : f32
    %28 = vector.broadcast %cst_20 : f32 to vector<8x128xf32>
    %29 = arith.maximumf %27, %28 : vector<8x128xf32>
    %30 = arith.index_cast %23 : i32 to index
    %c0_21 = arith.constant 0 : index
    %31 = vector.load %arg9[%30, %c0_21] : memref<64x128xf32, #tpu.memory_space<vmem>>, vector<8x128xf32>
    tpu.vector_store %arg9[%30, %c0_21], %29 {strides = array<i32>} : memref<64x128xf32, #tpu.memory_space<vmem>>, vector<8x128xf32>,
    %c2_i32 = arith.constant 2 : i32
    %c8_i32_22 = arith.constant 8 : i32
    %32 = arith.muli %c2_i32, %c8_i32_22 : i32
    %33 = tpu.assume_multiple %32, 8 : i32
    %34 = arith.index_cast %33 : i32 to index
    %c0_23 = arith.constant 0 : index
    %35 = vector.load %arg11[%34, %c0_23] : memref<64x128xf32, #tpu.memory_space<vmem>>, vector<8x128xf32>
    %cst_24 = arith.constant dense<0.000000e+00> : vector<8x128xf32>
    %36 = tpu.matmul %29, %10, %cst_24 {dimension_numbers = #tpu.dot_dimension_numbers<[1], [0], [0], [1], [0, 0, 1, 1], [], []>} : vector<8x128xf32>, vector<128x128xf32>, vector<8x128xf32> -> vector<8x128xf32>
    %37 = arith.addf %35, %36 : vector<8x128xf32>
    %cst_25 = arith.constant 0.000000e+00 : f32
    %38 = vector.broadcast %cst_25 : f32 to vector<8x128xf32>
    %39 = arith.maximumf %37, %38 : vector<8x128xf32>
    %40 = arith.index_cast %33 : i32 to index
    %c0_26 = arith.constant 0 : index
    %41 = vector.load %arg9[%40, %c0_26] : memref<64x128xf32, #tpu.memory_space<vmem>>, vector<8x128xf32>
    tpu.vector_store %arg9[%40, %c0_26], %39 {strides = array<i32>} : memref<64x128xf32, #tpu.memory_space<vmem>>, vector<8x128xf32>,
    %c3_i32 = arith.constant 3 : i32
    %c8_i32_27 = arith.constant 8 : i32
    %42 = arith.muli %c3_i32, %c8_i32_27 : i32
    %43 = tpu.assume_multiple %42, 8 : i32
    %44 = arith.index_cast %43 : i32 to index
    %c0_28 = arith.constant 0 : index
    %45 = vector.load %arg11[%44, %c0_28] : memref<64x128xf32, #tpu.memory_space<vmem>>, vector<8x128xf32>
    %cst_29 = arith.constant dense<0.000000e+00> : vector<8x128xf32>
    %46 = tpu.matmul %39, %10, %cst_29 {dimension_numbers = #tpu.dot_dimension_numbers<[1], [0], [0], [1], [0, 0, 1, 1], [], []>} : vector<8x128xf32>, vector<128x128xf32>, vector<8x128xf32> -> vector<8x128xf32>
    %47 = arith.addf %45, %46 : vector<8x128xf32>
    %cst_30 = arith.constant 0.000000e+00 : f32
    %48 = vector.broadcast %cst_30 : f32 to vector<8x128xf32>
    %49 = arith.maximumf %47, %48 : vector<8x128xf32>
    %50 = arith.index_cast %43 : i32 to index
    %c0_31 = arith.constant 0 : index
    %51 = vector.load %arg9[%50, %c0_31] : memref<64x128xf32, #tpu.memory_space<vmem>>, vector<8x128xf32>
    tpu.vector_store %arg9[%50, %c0_31], %49 {strides = array<i32>} : memref<64x128xf32, #tpu.memory_space<vmem>>, vector<8x128xf32>,
    %c4_i32 = arith.constant 4 : i32
    %c8_i32_32 = arith.constant 8 : i32
    %52 = arith.muli %c4_i32, %c8_i32_32 : i32
    %53 = tpu.assume_multiple %52, 8 : i32
    %54 = arith.index_cast %53 : i32 to index
    %c0_33 = arith.constant 0 : index
    %55 = vector.load %arg11[%54, %c0_33] : memref<64x128xf32, #tpu.memory_space<vmem>>, vector<8x128xf32>
    %cst_34 = arith.constant dense<0.000000e+00> : vector<8x128xf32>
    %56 = tpu.matmul %49, %10, %cst_34 {dimension_numbers = #tpu.dot_dimension_numbers<[1], [0], [0], [1], [0, 0, 1, 1], [], []>} : vector<8x128xf32>, vector<128x128xf32>, vector<8x128xf32> -> vector<8x128xf32>
    %57 = arith.addf %55, %56 : vector<8x128xf32>
    %cst_35 = arith.constant 0.000000e+00 : f32
    %58 = vector.broadcast %cst_35 : f32 to vector<8x128xf32>
    %59 = arith.maximumf %57, %58 : vector<8x128xf32>
    %60 = arith.index_cast %53 : i32 to index
    %c0_36 = arith.constant 0 : index
    %61 = vector.load %arg9[%60, %c0_36] : memref<64x128xf32, #tpu.memory_space<vmem>>, vector<8x128xf32>
    tpu.vector_store %arg9[%60, %c0_36], %59 {strides = array<i32>} : memref<64x128xf32, #tpu.memory_space<vmem>>, vector<8x128xf32>,
    %c5_i32 = arith.constant 5 : i32
    %c8_i32_37 = arith.constant 8 : i32
    %62 = arith.muli %c5_i32, %c8_i32_37 : i32
    %63 = tpu.assume_multiple %62, 8 : i32
    %64 = arith.index_cast %63 : i32 to index
    %c0_38 = arith.constant 0 : index
    %65 = vector.load %arg11[%64, %c0_38] : memref<64x128xf32, #tpu.memory_space<vmem>>, vector<8x128xf32>
    %cst_39 = arith.constant dense<0.000000e+00> : vector<8x128xf32>
    %66 = tpu.matmul %59, %10, %cst_39 {dimension_numbers = #tpu.dot_dimension_numbers<[1], [0], [0], [1], [0, 0, 1, 1], [], []>} : vector<8x128xf32>, vector<128x128xf32>, vector<8x128xf32> -> vector<8x128xf32>
    %67 = arith.addf %65, %66 : vector<8x128xf32>
    %cst_40 = arith.constant 0.000000e+00 : f32
    %68 = vector.broadcast %cst_40 : f32 to vector<8x128xf32>
    %69 = arith.maximumf %67, %68 : vector<8x128xf32>
    %70 = arith.index_cast %63 : i32 to index
    %c0_41 = arith.constant 0 : index
    %71 = vector.load %arg9[%70, %c0_41] : memref<64x128xf32, #tpu.memory_space<vmem>>, vector<8x128xf32>
    tpu.vector_store %arg9[%70, %c0_41], %69 {strides = array<i32>} : memref<64x128xf32, #tpu.memory_space<vmem>>, vector<8x128xf32>,
    %c6_i32 = arith.constant 6 : i32
    %c8_i32_42 = arith.constant 8 : i32
    %72 = arith.muli %c6_i32, %c8_i32_42 : i32
    %73 = tpu.assume_multiple %72, 8 : i32
    %74 = arith.index_cast %73 : i32 to index
    %c0_43 = arith.constant 0 : index
    %75 = vector.load %arg11[%74, %c0_43] : memref<64x128xf32, #tpu.memory_space<vmem>>, vector<8x128xf32>
    %cst_44 = arith.constant dense<0.000000e+00> : vector<8x128xf32>
    %76 = tpu.matmul %69, %10, %cst_44 {dimension_numbers = #tpu.dot_dimension_numbers<[1], [0], [0], [1], [0, 0, 1, 1], [], []>} : vector<8x128xf32>, vector<128x128xf32>, vector<8x128xf32> -> vector<8x128xf32>
    %77 = arith.addf %75, %76 : vector<8x128xf32>
    %cst_45 = arith.constant 0.000000e+00 : f32
    %78 = vector.broadcast %cst_45 : f32 to vector<8x128xf32>
    %79 = arith.maximumf %77, %78 : vector<8x128xf32>
    %80 = arith.index_cast %73 : i32 to index
    %c0_46 = arith.constant 0 : index
    %81 = vector.load %arg9[%80, %c0_46] : memref<64x128xf32, #tpu.memory_space<vmem>>, vector<8x128xf32>
    tpu.vector_store %arg9[%80, %c0_46], %79 {strides = array<i32>} : memref<64x128xf32, #tpu.memory_space<vmem>>, vector<8x128xf32>,
    %c7_i32 = arith.constant 7 : i32
    %c8_i32_47 = arith.constant 8 : i32
    %82 = arith.muli %c7_i32, %c8_i32_47 : i32
    %83 = tpu.assume_multiple %82, 8 : i32
    %84 = arith.index_cast %83 : i32 to index
    %c0_48 = arith.constant 0 : index
    %85 = vector.load %arg11[%84, %c0_48] : memref<64x128xf32, #tpu.memory_space<vmem>>, vector<8x128xf32>
    %cst_49 = arith.constant dense<0.000000e+00> : vector<8x128xf32>
    %86 = tpu.matmul %79, %10, %cst_49 {dimension_numbers = #tpu.dot_dimension_numbers<[1], [0], [0], [1], [0, 0, 1, 1], [], []>} : vector<8x128xf32>, vector<128x128xf32>, vector<8x128xf32> -> vector<8x128xf32>
    %87 = arith.addf %85, %86 : vector<8x128xf32>
    %cst_50 = arith.constant 0.000000e+00 : f32
    %88 = vector.broadcast %cst_50 : f32 to vector<8x128xf32>
    %89 = arith.maximumf %87, %88 : vector<8x128xf32>
    %90 = arith.index_cast %83 : i32 to index
    %c0_51 = arith.constant 0 : index
    %91 = vector.load %arg9[%90, %c0_51] : memref<64x128xf32, #tpu.memory_space<vmem>>, vector<8x128xf32>
    tpu.vector_store %arg9[%90, %c0_51], %89 {strides = array<i32>} : memref<64x128xf32, #tpu.memory_space<vmem>>, vector<8x128xf32>,
    %c8_i32_52 = arith.constant 8 : i32
    %c0_53 = arith.constant 0 : index
    %c0_54 = arith.constant 0 : index
    %92 = vector.load %arg10[%c0_53, %c0_54] : memref<8x128xf32, #tpu.memory_space<vmem>>, vector<8x128xf32>
    tpu.vector_store %arg10[%c0_53, %c0_54], %89 {strides = array<i32>} : memref<8x128xf32, #tpu.memory_space<vmem>>, vector<8x128xf32>,
    %c0_55 = arith.constant 0 : index
    %c0_56 = arith.constant 0 : index
    %93 = vector.load %arg9[%c0_55, %c0_56] : memref<64x128xf32, #tpu.memory_space<vmem>>, vector<64x128xf32>
    %c0_57 = arith.constant 0 : index
    %c0_58 = arith.constant 0 : index
    %94 = vector.load %arg6[%c0_57, %c0_58] : memref<128x128xf32, #tpu.memory_space<vmem>>, vector<128x128xf32>
    %cst_59 = arith.constant dense<0.000000e+00> : vector<64x128xf32>
    %95 = tpu.matmul %93, %94, %cst_59 {dimension_numbers = #tpu.dot_dimension_numbers<[1], [0], [0], [1], [0, 0, 1, 1], [], []>} : vector<64x128xf32>, vector<128x128xf32>, vector<64x128xf32> -> vector<64x128xf32>
    %c0_60 = arith.constant 0 : index
    %c0_61 = arith.constant 0 : index
    %96 = vector.load %arg7[%c0_60, %c0_61] : memref<1x128xf32, #tpu.memory_space<vmem>>, vector<1x128xf32>
    %97 = vector.broadcast %96 : vector<1x128xf32> to vector<64x128xf32>
    %98 = arith.addf %95, %97 : vector<64x128xf32>
    %c0_62 = arith.constant 0 : index
    %c0_63 = arith.constant 0 : index
    %99 = vector.load %arg8[%c0_62, %c0_63] : memref<64x128xf32, #tpu.memory_space<vmem>>, vector<64x128xf32>
    tpu.vector_store %arg8[%c0_62, %c0_63], %98 {strides = array<i32>} : memref<64x128xf32, #tpu.memory_space<vmem>>, vector<64x128xf32>,
    return
  }
  func.func @transform_0(%arg0: i32) -> (i32, i32) {
    %c0_i32 = arith.constant 0 : i32
    %c0_i32_0 = arith.constant 0 : i32
    return %arg0, %c0_i32 : i32, i32
  }
  func.func @transform_1(%arg0: i32) -> (i32, i32) {
    %c0_i32 = arith.constant 0 : i32
    %c0_i32_0 = arith.constant 0 : i32
    %c0_i32_1 = arith.constant 0 : i32
    return %c0_i32, %c0_i32_0 : i32, i32
  }
  func.func @transform_2(%arg0: i32) -> (i32, i32) {
    %c0_i32 = arith.constant 0 : i32
    %c0_i32_0 = arith.constant 0 : i32
    %c0_i32_1 = arith.constant 0 : i32
    return %c0_i32, %c0_i32_0 : i32, i32
  }
  func.func @transform_3(%arg0: i32) -> (i32, i32) {
    %c0_i32 = arith.constant 0 : i32
    %c0_i32_0 = arith.constant 0 : i32
    %c0_i32_1 = arith.constant 0 : i32
    return %c0_i32, %c0_i32_0 : i32, i32
  }
  func.func @transform_4(%arg0: i32) -> (i32, i32) {
    %c0_i32 = arith.constant 0 : i32
    %c0_i32_0 = arith.constant 0 : i32
    %c0_i32_1 = arith.constant 0 : i32
    return %c0_i32, %c0_i32_0 : i32, i32
  }
  func.func @transform_5(%arg0: i32) -> (i32, i32) {
    %c0_i32 = arith.constant 0 : i32
    %c0_i32_0 = arith.constant 0 : i32
    %c0_i32_1 = arith.constant 0 : i32
    return %c0_i32, %c0_i32_0 : i32, i32
  }
  func.func @transform_6(%arg0: i32) -> (i32, i32) {
    %c0_i32 = arith.constant 0 : i32
    %c0_i32_0 = arith.constant 0 : i32
    %c0_i32_1 = arith.constant 0 : i32
    return %c0_i32, %c0_i32_0 : i32, i32
  }
  func.func @transform_7(%arg0: i32) -> (i32, i32) {
    %c0_i32 = arith.constant 0 : i32
    %c0_i32_0 = arith.constant 0 : i32
    return %arg0, %c0_i32 : i32, i32
  }
  func.func @transform_8(%arg0: i32) -> (i32, i32) {
    %c0_i32 = arith.constant 0 : i32
    %c0_i32_0 = arith.constant 0 : i32
    return %arg0, %c0_i32 : i32, i32
  }
}

</mosaic_0001>

<llo_original>
// kernel: tpu_custom_call.1
$region0: #{tpu_custom_call.1}
  #allocation0 [shape = 'u32[]', space=smem, size = 0x4, offset = 0x4, fixed_abs, tag = 'smem constant byte address 0x4 - core index']
  #allocation1 [shape = 'u32[144,128]{1,0:T(1,128)}', space=vmem, size = 0x12000, scoped, tag = 'internal scratch']
  #allocation2 [shape = 'f32[8,128]{1,0:T(8,128)}', space=vmem, size = 0x1000, scoped, tag = 'scratch operand']
  #allocation3 [shape = 'f32[64,128]{1,0:T(8,128)}', space=vmem, size = 0x8000, scoped, tag = 'scratch operand']
  %s0 = inlined_call_operand.vmem [shape: f32[64,4], index: 0, kind: input, shape index: {}]
  %s1 = inlined_call_operand.vmem [shape: f32[8,128], index: 1, kind: input, shape index: {}]
  %s2 = inlined_call_operand.vmem [shape: f32[4,128], index: 2, kind: input, shape index: {}]
  %s3 = inlined_call_operand.hbm [shape: f32[128,128], index: 3, kind: input, shape index: {}]
  %s4 = inlined_call_operand.vmem [shape: f32[1,128], index: 4, kind: input, shape index: {}]
  %s5 = inlined_call_operand.hbm [shape: f32[128,128], index: 5, kind: input, shape index: {}]
  %s6 = inlined_call_operand.vmem [shape: f32[1,128], index: 6, kind: input, shape index: {}]
  %s7 = inlined_call_operand.hbm [shape: f32[64,128], index: 7, kind: output, shape index: {0}]
  %s8 = inlined_call_operand.hbm [shape: f32[64,128], index: 8, kind: output, shape index: {1}]
  %9 = xla_tuple %s7, %s8
  %s10 = sld [smem:[#allocation0]]
  $region58: #{tpu_custom_call.1} parent=0
    _
  %s12 = ssub.s32 1, %s10
  %s13 = scalar_select 0, %s12, %s10
  $region1: #{tpu_custom_call.1} parent=0
    #allocation4 [shape = 'u8[65536]{0}', space=vmem, size = 0x10000, scoped, tag = 'input window, operand 3, single buffered']
    #allocation5 [shape = 's32[1]{0}', space=sflag, size = 0x4, scoped, tag = 'scoped memory for tpu_custom_call.1']
    #allocation6 [shape = 's32[1]{0}', space=sflag, size = 0x4, scoped, tag = 'scoped memory for tpu_custom_call.1']
    #allocation7 [shape = 'u8[65536]{0}', space=vmem, size = 0x10000, scoped, tag = 'input window, operand 5, single buffered']
    #allocation8 [shape = 's32[1]{0}', space=sflag, size = 0x4, scoped, tag = 'scoped memory for tpu_custom_call.1']
    #allocation9 [shape = 'u8[32768]{0}', space=vmem, size = 0x8000, scoped, tag = 'output window, operand 0, single buffered']
    #allocation10 [shape = 'u8[32768]{0}', space=vmem, size = 0x8000, scoped, tag = 'output window, operand 1, single buffered']
    #allocation11 [shape = 's32[1]{0}', space=sflag, size = 0x4, scoped, tag = 'scoped memory for tpu_custom_call.1']
    %14 = vsyncpa [#allocation5], 0
    %15 = vsyncpa [#allocation8], 0
    %16 = vsyncpa [#allocation6], 0
    %17 = vsyncpa [#allocation11], 0
    // Predicated region
    $region2: #{tpu_custom_call.1} parent=1 // pred_check
      _
    $region3: #{tpu_custom_call.1} parent=1 // pred_check_branch
      %19 = sbr.rel (0) target = $region5
    $region4: #{tpu_custom_call.1} parent=1 // pred_region
      _
    $region5: #{tpu_custom_call.1} parent=1 // pred_fallthru
      _
    // Predicated region
    $region6: #{tpu_custom_call.1} parent=1 // pred_check
      _
    $region7: #{tpu_custom_call.1} parent=1 // pred_check_branch
      %21 = sbr.rel (0) target = $region9
    $region8: #{tpu_custom_call.1} parent=1 // pred_region
      _
    $region9: #{tpu_custom_call.1} parent=1 // pred_fallthru
      _
    // Predicated region
    $region10: #{tpu_custom_call.1} parent=1 // pred_check
      _
    $region11: #{tpu_custom_call.1} parent=1 // pred_check_branch
      %23 = sbr.rel (0) target = $region13
    $region12: #{tpu_custom_call.1} parent=1 // pred_region
      _
    $region13: #{tpu_custom_call.1} parent=1 // pred_fallthru
      _
    // Predicated region
    $region14: #{tpu_custom_call.1} parent=1 // pred_check
      _
    $region15: #{tpu_custom_call.1} parent=1 // pred_check_branch
      %25 = sbr.rel (0) target = $region17
    $region16: #{tpu_custom_call.1} parent=1 // pred_region
      %s27 = ssub.s32 2048, 2048
      %28 = vsyncadd [#allocation5], %s27
      %s29 = sshll.u32 [#allocation4], 4
      %s30 = int_to_ptr.vmem [resolvable:$true] %s29
      %35 = dma.hbm_to_vmem [thread:$0]  %s3, 2048, %s30, [#allocation5], 128, 128, 8
    $region17: #{tpu_custom_call.1} parent=1 // pred_fallthru
      _
    // Predicated region
    $region18: #{tpu_custom_call.1} parent=1 // pred_check
      _
    $region19: #{tpu_custom_call.1} parent=1 // pred_check_branch
      %37 = sbr.rel (0) target = $region21
    $region20: #{tpu_custom_call.1} parent=1 // pred_region
      _
    $region21: #{tpu_custom_call.1} parent=1 // pred_fallthru
      _
    // Predicated region
    $region22: #{tpu_custom_call.1} parent=1 // pred_check
      _
    $region23: #{tpu_custom_call.1} parent=1 // pred_check_branch
      %39 = sbr.rel (0) target = $region25
    $region24: #{tpu_custom_call.1} parent=1 // pred_region
      %s41 = ssub.s32 2048, 2048
      %42 = vsyncadd [#allocation8], %s41
      %s43 = sshll.u32 [#allocation7], 4
      %s44 = int_to_ptr.vmem [resolvable:$true] %s43
      %49 = dma.hbm_to_vmem [thread:$0]  %s5, 2048, %s44, [#allocation8], 128, 128, 8
    $region25: #{tpu_custom_call.1} parent=1 // pred_fallthru
      _
    // Predicated region
    $region26: #{tpu_custom_call.1} parent=1 // pred_check
      _
    $region27: #{tpu_custom_call.1} parent=1 // pred_check_branch
      %51 = sbr.rel (0) target = $region29
    $region28: #{tpu_custom_call.1} parent=1 // pred_region
      _
    $region29: #{tpu_custom_call.1} parent=1 // pred_fallthru
      _
    // Predicated region
    $region30: #{tpu_custom_call.1} parent=1 // pred_check
      _
    $region31: #{tpu_custom_call.1} parent=1 // pred_check_branch
      %53 = sbr.rel (0) target = $region33
    $region32: #{tpu_custom_call.1} parent=1 // pred_region
      %54 = dma.done [#allocation5], 2048
    $region33: #{tpu_custom_call.1} parent=1 // pred_fallthru
      _
    // Predicated region
    $region34: #{tpu_custom_call.1} parent=1 // pred_check
      _
    $region35: #{tpu_custom_call.1} parent=1 // pred_check_branch
      %56 = sbr.rel (0) target = $region37
    $region36: #{tpu_custom_call.1} parent=1 // pred_region
      %57 = dma.done [#allocation8], 2048
    $region37: #{tpu_custom_call.1} parent=1 // pred_fallthru
      _
    %p58 = scmp.eq.s32.totalorder 0, 0
    // Predicated region
    $region38: #{tpu_custom_call.1} parent=1 // pred_check
      %p59 = pneg %p58
    $region39: #{tpu_custom_call.1} parent=1 // pred_check_branch
      %61 = sbr.rel (%p59) target = $region41
    $region40: #{tpu_custom_call.1} parent=1 // pred_region
      %v62 = vld [vmem:[%s1] sm:$0xff]
      %63 = vst [vmem:[#allocation2] sm:$0xff] %v62
    $region41: #{tpu_custom_call.1} parent=1 // pred_fallthru
      _
    %v64 = vld [vmem:[%s0] sm:$0xff]
    %v65 = vld [vmem:[%s0 + $0x8] sm:$0xff]
    %v66 = vld [vmem:[%s0 + $0x10] sm:$0xff]
    %v67 = vld [vmem:[%s0 + $0x18] sm:$0xff]
    %v68 = vld [vmem:[%s0 + $0x20] sm:$0xff]
    %v69 = vld [vmem:[%s0 + $0x28] sm:$0xff]
    %v70 = vld [vmem:[%s0 + $0x30] sm:$0xff]
    %v71 = vld [vmem:[%s0 + $0x38] sm:$0xff]
    %v72 = vld [vmem:[%s2] sm:$0xf]
    %v73 = vld [vmem:[%s4] sm:$0x1]
    %v75 = vlaneseq
    %v76 = vshrl.u32 %v75, 7
    %v77 = vsub.s32 0, %v76
    %v78 = vrot.slane %v73, %v77
    %vm80 = vcmask 31744
    %v82 = vsel %vm80, %v64, 0
    %v85 = vsel %vm80, %v65, 0
    %v88 = vsel %vm80, %v66, 0
    %v91 = vsel %vm80, %v67, 0
    %v94 = vsel %vm80, %v68, 0
    %v97 = vsel %vm80, %v69, 0
    %v100 = vsel %vm80, %v70, 0
    %v103 = vsel %vm80, %v71, 0
    %vm105 = vcmask 1043456
    %v107 = vsel %vm105, %v72, 0
    %109 = vmatprep.subr.mxu0 0.0
    %110 = vmatpush1.msra.mxu0 0.0
    %111 = vmatprep.subr.mxu0 0.0
    %112 = vmatpush1.msra.mxu0 0.0
    %113 = vmatprep.subr.mxu0 0.0
    %114 = vmatpush1.msra.mxu0 0.0
    %115 = vmatprep.subr.mxu0 0.0
    %116 = vmatpush1.msra.mxu0 0.0
    %117 = vmatprep.subr.mxu0 0.0
    %118 = vmatpush1.msra.mxu0 0.0
    %119 = vmatprep.subr.mxu0 0.0
    %120 = vmatpush1.msra.mxu0 0.0
    %121 = vmatprep.subr.mxu0 0.0
    %122 = vmatpush1.msra.mxu0 0.0
    %123 = vmatprep.subr.mxu0 0.0
    %124 = vmatpush1.msra.mxu0 0.0
    %125 = vmatprep.subr.mxu0 0.0
    %126 = vmatpush1.msra.mxu0 0.0
    %127 = vmatprep.subr.mxu0 0.0
    %128 = vmatpush1.msra.mxu0 0.0
    %129 = vmatprep.subr.mxu0 0.0
    %130 = vmatpush1.msra.mxu0 0.0
    %131 = vmatprep.subr.mxu0 0.0
    %132 = vmatpush1.msra.mxu0 0.0
    %133 = vmatprep.subr.mxu0 0.0
    %134 = vmatpush1.msra.mxu0 0.0
    %135 = vmatprep.subr.mxu0 0.0
    %136 = vmatpush1.msra.mxu0 0.0
    %137 = vmatprep.subr.mxu0 0.0
    %138 = vmatpush1.msra.mxu0 0.0
    %139 = vmatprep.subr.mxu0 0.0
    %140 = vmatpush1.msra.mxu0 %v107
    %141 = vmatprep.subr.mxu0 0.0
    %142 = vmatpush2.msra.mxu0 0.0
    %143 = vmatprep.subr.mxu0 0.0
    %144 = vmatpush2.msra.mxu0 0.0
    %145 = vmatprep.subr.mxu0 0.0
    %146 = vmatpush2.msra.mxu0 0.0
    %147 = vmatprep.subr.mxu0 0.0
    %148 = vmatpush2.msra.mxu0 0.0
    %149 = vmatprep.subr.mxu0 0.0
    %150 = vmatpush2.msra.mxu0 0.0
    %151 = vmatprep.subr.mxu0 0.0
    %152 = vmatpush2.msra.mxu0 0.0
    %153 = vmatprep.subr.mxu0 0.0
    %154 = vmatpush2.msra.mxu0 0.0
    %155 = vmatprep.subr.mxu0 0.0
    %156 = vmatpush2.msra.mxu0 0.0
    %157 = vmatprep.subr.mxu0 0.0
    %158 = vmatpush2.msra.mxu0 0.0
    %159 = vmatprep.subr.mxu0 0.0
    %160 = vmatpush2.msra.mxu0 0.0
    %161 = vmatprep.subr.mxu0 0.0
    %162 = vmatpush2.msra.mxu0 0.0
    %163 = vmatprep.subr.mxu0 0.0
    %164 = vmatpush2.msra.mxu0 0.0
    %165 = vmatprep.subr.mxu0 0.0
    %166 = vmatpush2.msra.mxu0 0.0
    %167 = vmatprep.subr.mxu0 0.0
    %168 = vmatpush2.msra.mxu0 0.0
    %169 = vmatprep.subr.mxu0 0.0
    %170 = vmatpush2.msra.mxu0 0.0
    %171 = vmatprep.subr.mxu0 0.0
    %172 = vmatpush2.msra.mxu0 0.0
    %173 = vmatprep.mubr.f32.mxu0 0.0
    %174 = vmatmul.mubr.f32.gmra.mxu0 %v82
    %v175 = vpop.f32.mrf.mxu0
    %v176 = vadd.f32 %v78, %v175
    %v177 = vpop.f32.mrf.mxu0
    %178 = vmatprep.mubr.f32.mxu0 0.0
    %179 = vmatmul.mubr.f32.gmra.mxu0 %v85
    %v180 = vpop.f32.mrf.mxu0
    %v181 = vadd.f32 %v78, %v180
    %v182 = vpop.f32.mrf.mxu0
    %183 = vmatprep.mubr.f32.mxu0 0.0
    %184 = vmatmul.mubr.f32.gmra.mxu0 %v88
    %v185 = vpop.f32.mrf.mxu0
    %v186 = vadd.f32 %v78, %v185
    %v187 = vpop.f32.mrf.mxu0
    %188 = vmatprep.mubr.f32.mxu0 0.0
    %189 = vmatmul.mubr.f32.gmra.mxu0 %v91
    %v190 = vpop.f32.mrf.mxu0
    %v191 = vadd.f32 %v78, %v190
    %v192 = vpop.f32.mrf.mxu0
    %193 = vmatprep.mubr.f32.mxu0 0.0
    %194 = vmatmul.mubr.f32.gmra.mxu0 %v94
    %v195 = vpop.f32.mrf.mxu0
    %v196 = vadd.f32 %v78, %v195
    %v197 = vpop.f32.mrf.mxu0
    %198 = vmatprep.mubr.f32.mxu0 0.0
    %199 = vmatmul.mubr.f32.gmra.mxu0 %v97
    %v200 = vpop.f32.mrf.mxu0
    %v201 = vadd.f32 %v78, %v200
    %v202 = vpop.f32.mrf.mxu0
    %203 = vmatprep.mubr.f32.mxu0 0.0
    %204 = vmatmul.mubr.f32.gmra.mxu0 %v100
    %v205 = vpop.f32.mrf.mxu0
    %v206 = vadd.f32 %v78, %v205
    %v207 = vpop.f32.mrf.mxu0
    %208 = vmatprep.mubr.f32.mxu0 0.0
    %209 = vmatmul.mubr.f32.gmra.mxu0 %v103
    %v210 = vpop.f32.mrf.mxu0
    %v211 = vadd.f32 %v78, %v210
    %v212 = vpop.f32.mrf.mxu0
    %213 = vdwg.mxu0
    %214 = vst [vmem:[#allocation3] sm:$0xff] %v176
    %215 = vst [vmem:[#allocation3 + $0x8] sm:$0xff] %v181
    %216 = vst [vmem:[#allocation3 + $0x10] sm:$0xff] %v186
    %217 = vst [vmem:[#allocation3 + $0x18] sm:$0xff] %v191
    %218 = vst [vmem:[#allocation3 + $0x20] sm:$0xff] %v196
    %219 = vst [vmem:[#allocation3 + $0x28] sm:$0xff] %v201
    %220 = vst [vmem:[#allocation3 + $0x30] sm:$0xff] %v206
    %221 = vst [vmem:[#allocation3 + $0x38] sm:$0xff] %v211
    %v222 = vld [vmem:[#allocation4] sm:$0xff]
    %v223 = vld [vmem:[#allocation4 + $0x8] sm:$0xff]
    %v224 = vld [vmem:[#allocation4 + $0x10] sm:$0xff]
    %v225 = vld [vmem:[#allocation4 + $0x18] sm:$0xff]
    %v226 = vld [vmem:[#allocation4 + $0x20] sm:$0xff]
    %v227 = vld [vmem:[#allocation4 + $0x28] sm:$0xff]
    %v228 = vld [vmem:[#allocation4 + $0x30] sm:$0xff]
    %v229 = vld [vmem:[#allocation4 + $0x38] sm:$0xff]
    %v230 = vld [vmem:[#allocation4 + $0x40] sm:$0xff]
    %v231 = vld [vmem:[#allocation4 + $0x48] sm:$0xff]
    %v232 = vld [vmem:[#allocation4 + $0x50] sm:$0xff]
    %v233 = vld [vmem:[#allocation4 + $0x58] sm:$0xff]
    %v234 = vld [vmem:[#allocation4 + $0x60] sm:$0xff]
    %v235 = vld [vmem:[#allocation4 + $0x68] sm:$0xff]
    %v236 = vld [vmem:[#allocation4 + $0x70] sm:$0xff]
    %v237 = vld [vmem:[#allocation4 + $0x78] sm:$0xff]
    %v238 = vld [vmem:[#allocation2] sm:$0xff]
    %v239 = vld [vmem:[#allocation3] sm:$0xff]
    %240 = vmatprep.subr.mxu0 0.0
    %241 = vmatpush1.msra.mxu0 %v237
    %242 = vmatprep.subr.mxu0 0.0
    %243 = vmatpush1.msra.mxu0 %v236
    %244 = vmatprep.subr.mxu0 0.0
    %245 = vmatpush1.msra.mxu0 %v235
    %246 = vmatprep.subr.mxu0 0.0
    %247 = vmatpush1.msra.mxu0 %v234
    %248 = vmatprep.subr.mxu0 0.0
    %249 = vmatpush1.msra.mxu0 %v233
    %250 = vmatprep.subr.mxu0 0.0
    %251 = vmatpush1.msra.mxu0 %v232
    %252 = vmatprep.subr.mxu0 0.0
    %253 = vmatpush1.msra.mxu0 %v231
    %254 = vmatprep.subr.mxu0 0.0
    %255 = vmatpush1.msra.mxu0 %v230
    %256 = vmatprep.subr.mxu0 0.0
    %257 = vmatpush1.msra.mxu0 %v229
    %258 = vmatprep.subr.mxu0 0.0
    %259 = vmatpush1.msra.mxu0 %v228
    %260 = vmatprep.subr.mxu0 0.0
    %261 = vmatpush1.msra.mxu0 %v227
    %262 = vmatprep.subr.mxu0 0.0
    %263 = vmatpush1.msra.mxu0 %v226
    %264 = vmatprep.subr.mxu0 0.0
    %265 = vmatpush1.msra.mxu0 %v225
    %266 = vmatprep.subr.mxu0 0.0
    %267 = vmatpush1.msra.mxu0 %v224
    %268 = vmatprep.subr.mxu0 0.0
    %269 = vmatpush1.msra.mxu0 %v223
    %270 = vmatprep.subr.mxu0 0.0
    %271 = vmatpush1.msra.mxu0 %v222
    %272 = vmatprep.subr.mxu0 0.0
    %273 = vmatpush2.msra.mxu0 0.0
    %274 = vmatprep.subr.mxu0 0.0
    %275 = vmatpush2.msra.mxu0 0.0
    %276 = vmatprep.subr.mxu0 0.0
    %277 = vmatpush2.msra.mxu0 0.0
    %278 = vmatprep.subr.mxu0 0.0
    %279 = vmatpush2.msra.mxu0 0.0
    %280 = vmatprep.subr.mxu0 0.0
    %281 = vmatpush2.msra.mxu0 0.0
    %282 = vmatprep.subr.mxu0 0.0
    %283 = vmatpush2.msra.mxu0 0.0
    %284 = vmatprep.subr.mxu0 0.0
    %285 = vmatpush2.msra.mxu0 0.0
    %286 = vmatprep.subr.mxu0 0.0
    %287 = vmatpush2.msra.mxu0 0.0
    %288 = vmatprep.subr.mxu0 0.0
    %289 = vmatpush2.msra.mxu0 0.0
    %290 = vmatprep.subr.mxu0 0.0
    %291 = vmatpush2.msra.mxu0 0.0
    %292 = vmatprep.subr.mxu0 0.0
    %293 = vmatpush2.msra.mxu0 0.0
    %294 = vmatprep.subr.mxu0 0.0
    %295 = vmatpush2.msra.mxu0 0.0
    %296 = vmatprep.subr.mxu0 0.0
    %297 = vmatpush2.msra.mxu0 0.0
    %298 = vmatprep.subr.mxu0 0.0
    %299 = vmatpush2.msra.mxu0 0.0
    %300 = vmatprep.subr.mxu0 0.0
    %301 = vmatpush2.msra.mxu0 0.0
    %302 = vmatprep.subr.mxu0 0.0
    %303 = vmatpush2.msra.mxu0 0.0
    %304 = vmatprep.mubr.f32.mxu0 0.0
    %305 = vmatmul.mubr.f32.gmra.mxu0 %v238
    %v306 = vpop.f32.mrf.mxu0
    %v307 = vadd.f32 0.0, %v306
    %v308 = vpop.f32.mrf.mxu0
    %309 = vdwg.mxu0
    %v310 = vadd.f32 %v239, %v307
    %v311 = vmax.f32 %v310, 0.0
    %312 = vst [vmem:[#allocation10] sm:$0xff] %v311
    %s313 = scalar_lea.vmem [#allocation3], 8
    %v314 = vld [vmem:[%s313] sm:$0xff]
    %315 = vmatprep.subr.mxu0 0.0
    %316 = vmatpush1.msra.mxu0 %v237
    %317 = vmatprep.subr.mxu0 0.0
    %318 = vmatpush1.msra.mxu0 %v236
    %319 = vmatprep.subr.mxu0 0.0
    %320 = vmatpush1.msra.mxu0 %v235
    %321 = vmatprep.subr.mxu0 0.0
    %322 = vmatpush1.msra.mxu0 %v234
    %323 = vmatprep.subr.mxu0 0.0
    %324 = vmatpush1.msra.mxu0 %v233
    %325 = vmatprep.subr.mxu0 0.0
    %326 = vmatpush1.msra.mxu0 %v232
    %327 = vmatprep.subr.mxu0 0.0
    %328 = vmatpush1.msra.mxu0 %v231
    %329 = vmatprep.subr.mxu0 0.0
    %330 = vmatpush1.msra.mxu0 %v230
    %331 = vmatprep.subr.mxu0 0.0
    %332 = vmatpush1.msra.mxu0 %v229
    %333 = vmatprep.subr.mxu0 0.0
    %334 = vmatpush1.msra.mxu0 %v228
    %335 = vmatprep.subr.mxu0 0.0
    %336 = vmatpush1.msra.mxu0 %v227
    %337 = vmatprep.subr.mxu0 0.0
    %338 = vmatpush1.msra.mxu0 %v226
    %339 = vmatprep.subr.mxu0 0.0
    %340 = vmatpush1.msra.mxu0 %v225
    %341 = vmatprep.subr.mxu0 0.0
    %342 = vmatpush1.msra.mxu0 %v224
    %343 = vmatprep.subr.mxu0 0.0
    %344 = vmatpush1.msra.mxu0 %v223
    %345 = vmatprep.subr.mxu0 0.0
    %346 = vmatpush1.msra.mxu0 %v222
    %347 = vmatprep.subr.mxu0 0.0
    %348 = vmatpush2.msra.mxu0 0.0
    %349 = vmatprep.subr.mxu0 0.0
    %350 = vmatpush2.msra.mxu0 0.0
    %351 = vmatprep.subr.mxu0 0.0
    %352 = vmatpush2.msra.mxu0 0.0
    %353 = vmatprep.subr.mxu0 0.0
    %354 = vmatpush2.msra.mxu0 0.0
    %355 = vmatprep.subr.mxu0 0.0
    %356 = vmatpush2.msra.mxu0 0.0
    %357 = vmatprep.subr.mxu0 0.0
    %358 = vmatpush2.msra.mxu0 0.0
    %359 = vmatprep.subr.mxu0 0.0
    %360 = vmatpush2.msra.mxu0 0.0
    %361 = vmatprep.subr.mxu0 0.0
    %362 = vmatpush2.msra.mxu0 0.0
    %363 = vmatprep.subr.mxu0 0.0
    %364 = vmatpush2.msra.mxu0 0.0
    %365 = vmatprep.subr.mxu0 0.0
    %366 = vmatpush2.msra.mxu0 0.0
    %367 = vmatprep.subr.mxu0 0.0
    %368 = vmatpush2.msra.mxu0 0.0
    %369 = vmatprep.subr.mxu0 0.0
    %370 = vmatpush2.msra.mxu0 0.0
    %371 = vmatprep.subr.mxu0 0.0
    %372 = vmatpush2.msra.mxu0 0.0
    %373 = vmatprep.subr.mxu0 0.0
    %374 = vmatpush2.msra.mxu0 0.0
    %375 = vmatprep.subr.mxu0 0.0
    %376 = vmatpush2.msra.mxu0 0.0
    %377 = vmatprep.subr.mxu0 0.0
    %378 = vmatpush2.msra.mxu0 0.0
    %379 = vmatprep.mubr.f32.mxu0 0.0
    %380 = vmatmul.mubr.f32.gmra.mxu0 %v311
    %v381 = vpop.f32.mrf.mxu0
    %v382 = vadd.f32 0.0, %v381
    %v383 = vpop.f32.mrf.mxu0
    %384 = vdwg.mxu0
    %v385 = vadd.f32 %v314, %v382
    %v386 = vmax.f32 %v385, 0.0
    %s387 = scalar_lea.vmem [#allocation10], 8
    %388 = vst [vmem:[%s387] sm:$0xff] %v386
    %s389 = scalar_lea.vmem [#allocation3], 16
    %v390 = vld [vmem:[%s389] sm:$0xff]
    %391 = vmatprep.subr.mxu0 0.0
    %392 = vmatpush1.msra.mxu0 %v237
    %393 = vmatprep.subr.mxu0 0.0
    %394 = vmatpush1.msra.mxu0 %v236
    %395 = vmatprep.subr.mxu0 0.0
    %396 = vmatpush1.msra.mxu0 %v235
    %397 = vmatprep.subr.mxu0 0.0
    %398 = vmatpush1.msra.mxu0 %v234
    %399 = vmatprep.subr.mxu0 0.0
    %400 = vmatpush1.msra.mxu0 %v233
    %401 = vmatprep.subr.mxu0 0.0
    %402 = vmatpush1.msra.mxu0 %v232
    %403 = vmatprep.subr.mxu0 0.0
    %404 = vmatpush1.msra.mxu0 %v231
    %405 = vmatprep.subr.mxu0 0.0
    %406 = vmatpush1.msra.mxu0 %v230
    %407 = vmatprep.subr.mxu0 0.0
    %408 = vmatpush1.msra.mxu0 %v229
    %409 = vmatprep.subr.mxu0 0.0
    %410 = vmatpush1.msra.mxu0 %v228
    %411 = vmatprep.subr.mxu0 0.0
    %412 = vmatpush1.msra.mxu0 %v227
    %413 = vmatprep.subr.mxu0 0.0
    %414 = vmatpush1.msra.mxu0 %v226
    %415 = vmatprep.subr.mxu0 0.0
    %416 = vmatpush1.msra.mxu0 %v225
    %417 = vmatprep.subr.mxu0 0.0
    %418 = vmatpush1.msra.mxu0 %v224
    %419 = vmatprep.subr.mxu0 0.0
    %420 = vmatpush1.msra.mxu0 %v223
    %421 = vmatprep.subr.mxu0 0.0
    %422 = vmatpush1.msra.mxu0 %v222
    %423 = vmatprep.subr.mxu0 0.0
    %424 = vmatpush2.msra.mxu0 0.0
    %425 = vmatprep.subr.mxu0 0.0
    %426 = vmatpush2.msra.mxu0 0.0
    %427 = vmatprep.subr.mxu0 0.0
    %428 = vmatpush2.msra.mxu0 0.0
    %429 = vmatprep.subr.mxu0 0.0
    %430 = vmatpush2.msra.mxu0 0.0
    %431 = vmatprep.subr.mxu0 0.0
    %432 = vmatpush2.msra.mxu0 0.0
    %433 = vmatprep.subr.mxu0 0.0
    %434 = vmatpush2.msra.mxu0 0.0
    %435 = vmatprep.subr.mxu0 0.0
    %436 = vmatpush2.msra.mxu0 0.0
    %437 = vmatprep.subr.mxu0 0.0
    %438 = vmatpush2.msra.mxu0 0.0
    %439 = vmatprep.subr.mxu0 0.0
    %440 = vmatpush2.msra.mxu0 0.0
    %441 = vmatprep.subr.mxu0 0.0
    %442 = vmatpush2.msra.mxu0 0.0
    %443 = vmatprep.subr.mxu0 0.0
    %444 = vmatpush2.msra.mxu0 0.0
    %445 = vmatprep.subr.mxu0 0.0
    %446 = vmatpush2.msra.mxu0 0.0
    %447 = vmatprep.subr.mxu0 0.0
    %448 = vmatpush2.msra.mxu0 0.0
    %449 = vmatprep.subr.mxu0 0.0
    %450 = vmatpush2.msra.mxu0 0.0
    %451 = vmatprep.subr.mxu0 0.0
    %452 = vmatpush2.msra.mxu0 0.0
    %453 = vmatprep.subr.mxu0 0.0
    %454 = vmatpush2.msra.mxu0 0.0
    %455 = vmatprep.mubr.f32.mxu0 0.0
    %456 = vmatmul.mubr.f32.gmra.mxu0 %v386
    %v457 = vpop.f32.mrf.mxu0
    %v458 = vadd.f32 0.0, %v457
    %v459 = vpop.f32.mrf.mxu0
    %460 = vdwg.mxu0
    %v461 = vadd.f32 %v390, %v458
    %v462 = vmax.f32 %v461, 0.0
    %s463 = scalar_lea.vmem [#allocation10], 16
    %464 = vst [vmem:[%s463] sm:$0xff] %v462
    %s465 = scalar_lea.vmem [#allocation3], 24
    %v466 = vld [vmem:[%s465] sm:$0xff]
    %467 = vmatprep.subr.mxu0 0.0
    %468 = vmatpush1.msra.mxu0 %v237
    %469 = vmatprep.subr.mxu0 0.0
    %470 = vmatpush1.msra.mxu0 %v236
    %471 = vmatprep.subr.mxu0 0.0
    %472 = vmatpush1.msra.mxu0 %v235
    %473 = vmatprep.subr.mxu0 0.0
    %474 = vmatpush1.msra.mxu0 %v234
    %475 = vmatprep.subr.mxu0 0.0
    %476 = vmatpush1.msra.mxu0 %v233
    %477 = vmatprep.subr.mxu0 0.0
    %478 = vmatpush1.msra.mxu0 %v232
    %479 = vmatprep.subr.mxu0 0.0
    %480 = vmatpush1.msra.mxu0 %v231
    %481 = vmatprep.subr.mxu0 0.0
    %482 = vmatpush1.msra.mxu0 %v230
    %483 = vmatprep.subr.mxu0 0.0
    %484 = vmatpush1.msra.mxu0 %v229
    %485 = vmatprep.subr.mxu0 0.0
    %486 = vmatpush1.msra.mxu0 %v228
    %487 = vmatprep.subr.mxu0 0.0
    %488 = vmatpush1.msra.mxu0 %v227
    %489 = vmatprep.subr.mxu0 0.0
    %490 = vmatpush1.msra.mxu0 %v226
    %491 = vmatprep.subr.mxu0 0.0
    %492 = vmatpush1.msra.mxu0 %v225
    %493 = vmatprep.subr.mxu0 0.0
    %494 = vmatpush1.msra.mxu0 %v224
    %495 = vmatprep.subr.mxu0 0.0
    %496 = vmatpush1.msra.mxu0 %v223
    %497 = vmatprep.subr.mxu0 0.0
    %498 = vmatpush1.msra.mxu0 %v222
    %499 = vmatprep.subr.mxu0 0.0
    %500 = vmatpush2.msra.mxu0 0.0
    %501 = vmatprep.subr.mxu0 0.0
    %502 = vmatpush2.msra.mxu0 0.0
    %503 = vmatprep.subr.mxu0 0.0
    %504 = vmatpush2.msra.mxu0 0.0
    %505 = vmatprep.subr.mxu0 0.0
    %506 = vmatpush2.msra.mxu0 0.0
    %507 = vmatprep.subr.mxu0 0.0
    %508 = vmatpush2.msra.mxu0 0.0
    %509 = vmatprep.subr.mxu0 0.0
    %510 = vmatpush2.msra.mxu0 0.0
    %511 = vmatprep.subr.mxu0 0.0
    %512 = vmatpush2.msra.mxu0 0.0
    %513 = vmatprep.subr.mxu0 0.0
    %514 = vmatpush2.msra.mxu0 0.0
    %515 = vmatprep.subr.mxu0 0.0
    %516 = vmatpush2.msra.mxu0 0.0
    %517 = vmatprep.subr.mxu0 0.0
    %518 = vmatpush2.msra.mxu0 0.0
    %519 = vmatprep.subr.mxu0 0.0
    %520 = vmatpush2.msra.mxu0 0.0
    %521 = vmatprep.subr.mxu0 0.0
    %522 = vmatpush2.msra.mxu0 0.0
    %523 = vmatprep.subr.mxu0 0.0
    %524 = vmatpush2.msra.mxu0 0.0
    %525 = vmatprep.subr.mxu0 0.0
    %526 = vmatpush2.msra.mxu0 0.0
    %527 = vmatprep.subr.mxu0 0.0
    %528 = vmatpush2.msra.mxu0 0.0
    %529 = vmatprep.subr.mxu0 0.0
    %530 = vmatpush2.msra.mxu0 0.0
    %531 = vmatprep.mubr.f32.mxu0 0.0
    %532 = vmatmul.mubr.f32.gmra.mxu0 %v462
    %v533 = vpop.f32.mrf.mxu0
    %v534 = vadd.f32 0.0, %v533
    %v535 = vpop.f32.mrf.mxu0
    %536 = vdwg.mxu0
    %v537 = vadd.f32 %v466, %v534
    %v538 = vmax.f32 %v537, 0.0
    %s539 = scalar_lea.vmem [#allocation10], 24
    %540 = vst [vmem:[%s539] sm:$0xff] %v538
    %s541 = scalar_lea.vmem [#allocation3], 32
    %v542 = vld [vmem:[%s541] sm:$0xff]
    %543 = vmatprep.subr.mxu0 0.0
    %544 = vmatpush1.msra.mxu0 %v237
    %545 = vmatprep.subr.mxu0 0.0
    %546 = vmatpush1.msra.mxu0 %v236
    %547 = vmatprep.subr.mxu0 0.0
    %548 = vmatpush1.msra.mxu0 %v235
    %549 = vmatprep.subr.mxu0 0.0
    %550 = vmatpush1.msra.mxu0 %v234
    %551 = vmatprep.subr.mxu0 0.0
    %552 = vmatpush1.msra.mxu0 %v233
    %553 = vmatprep.subr.mxu0 0.0
    %554 = vmatpush1.msra.mxu0 %v232
    %555 = vmatprep.subr.mxu0 0.0
    %556 = vmatpush1.msra.mxu0 %v231
    %557 = vmatprep.subr.mxu0 0.0
    %558 = vmatpush1.msra.mxu0 %v230
    %559 = vmatprep.subr.mxu0 0.0
    %560 = vmatpush1.msra.mxu0 %v229
    %561 = vmatprep.subr.mxu0 0.0
    %562 = vmatpush1.msra.mxu0 %v228
    %563 = vmatprep.subr.mxu0 0.0
    %564 = vmatpush1.msra.mxu0 %v227
    %565 = vmatprep.subr.mxu0 0.0
    %566 = vmatpush1.msra.mxu0 %v226
    %567 = vmatprep.subr.mxu0 0.0
    %568 = vmatpush1.msra.mxu0 %v225
    %569 = vmatprep.subr.mxu0 0.0
    %570 = vmatpush1.msra.mxu0 %v224
    %571 = vmatprep.subr.mxu0 0.0
    %572 = vmatpush1.msra.mxu0 %v223
    %573 = vmatprep.subr.mxu0 0.0
    %574 = vmatpush1.msra.mxu0 %v222
    %575 = vmatprep.subr.mxu0 0.0
    %576 = vmatpush2.msra.mxu0 0.0
    %577 = vmatprep.subr.mxu0 0.0
    %578 = vmatpush2.msra.mxu0 0.0
    %579 = vmatprep.subr.mxu0 0.0
    %580 = vmatpush2.msra.mxu0 0.0
    %581 = vmatprep.subr.mxu0 0.0
    %582 = vmatpush2.msra.mxu0 0.0
    %583 = vmatprep.subr.mxu0 0.0
    %584 = vmatpush2.msra.mxu0 0.0
    %585 = vmatprep.subr.mxu0 0.0
    %586 = vmatpush2.msra.mxu0 0.0
    %587 = vmatprep.subr.mxu0 0.0
    %588 = vmatpush2.msra.mxu0 0.0
    %589 = vmatprep.subr.mxu0 0.0
    %590 = vmatpush2.msra.mxu0 0.0
    %591 = vmatprep.subr.mxu0 0.0
    %592 = vmatpush2.msra.mxu0 0.0
    %593 = vmatprep.subr.mxu0 0.0
    %594 = vmatpush2.msra.mxu0 0.0
    %595 = vmatprep.subr.mxu0 0.0
    %596 = vmatpush2.msra.mxu0 0.0
    %597 = vmatprep.subr.mxu0 0.0
    %598 = vmatpush2.msra.mxu0 0.0
    %599 = vmatprep.subr.mxu0 0.0
    %600 = vmatpush2.msra.mxu0 0.0
    %601 = vmatprep.subr.mxu0 0.0
    %602 = vmatpush2.msra.mxu0 0.0
    %603 = vmatprep.subr.mxu0 0.0
    %604 = vmatpush2.msra.mxu0 0.0
    %605 = vmatprep.subr.mxu0 0.0
    %606 = vmatpush2.msra.mxu0 0.0
    %607 = vmatprep.mubr.f32.mxu0 0.0
    %608 = vmatmul.mubr.f32.gmra.mxu0 %v538
    %v609 = vpop.f32.mrf.mxu0
    %v610 = vadd.f32 0.0, %v609
    %v611 = vpop.f32.mrf.mxu0
    %612 = vdwg.mxu0
    %v613 = vadd.f32 %v542, %v610
    %v614 = vmax.f32 %v613, 0.0
    %s615 = scalar_lea.vmem [#allocation10], 32
    %616 = vst [vmem:[%s615] sm:$0xff] %v614
    %s617 = scalar_lea.vmem [#allocation3], 40
    %v618 = vld [vmem:[%s617] sm:$0xff]
    %619 = vmatprep.subr.mxu0 0.0
    %620 = vmatpush1.msra.mxu0 %v237
    %621 = vmatprep.subr.mxu0 0.0
    %622 = vmatpush1.msra.mxu0 %v236
    %623 = vmatprep.subr.mxu0 0.0
    %624 = vmatpush1.msra.mxu0 %v235
    %625 = vmatprep.subr.mxu0 0.0
    %626 = vmatpush1.msra.mxu0 %v234
    %627 = vmatprep.subr.mxu0 0.0
    %628 = vmatpush1.msra.mxu0 %v233
    %629 = vmatprep.subr.mxu0 0.0
    %630 = vmatpush1.msra.mxu0 %v232
    %631 = vmatprep.subr.mxu0 0.0
    %632 = vmatpush1.msra.mxu0 %v231
    %633 = vmatprep.subr.mxu0 0.0
    %634 = vmatpush1.msra.mxu0 %v230
    %635 = vmatprep.subr.mxu0 0.0
    %636 = vmatpush1.msra.mxu0 %v229
    %637 = vmatprep.subr.mxu0 0.0
    %638 = vmatpush1.msra.mxu0 %v228
    %639 = vmatprep.subr.mxu0 0.0
    %640 = vmatpush1.msra.mxu0 %v227
    %641 = vmatprep.subr.mxu0 0.0
    %642 = vmatpush1.msra.mxu0 %v226
    %643 = vmatprep.subr.mxu0 0.0
    %644 = vmatpush1.msra.mxu0 %v225
    %645 = vmatprep.subr.mxu0 0.0
    %646 = vmatpush1.msra.mxu0 %v224
    %647 = vmatprep.subr.mxu0 0.0
    %648 = vmatpush1.msra.mxu0 %v223
    %649 = vmatprep.subr.mxu0 0.0
    %650 = vmatpush1.msra.mxu0 %v222
    %651 = vmatprep.subr.mxu0 0.0
    %652 = vmatpush2.msra.mxu0 0.0
    %653 = vmatprep.subr.mxu0 0.0
    %654 = vmatpush2.msra.mxu0 0.0
    %655 = vmatprep.subr.mxu0 0.0
    %656 = vmatpush2.msra.mxu0 0.0
    %657 = vmatprep.subr.mxu0 0.0
    %658 = vmatpush2.msra.mxu0 0.0
    %659 = vmatprep.subr.mxu0 0.0
    %660 = vmatpush2.msra.mxu0 0.0
    %661 = vmatprep.subr.mxu0 0.0
    %662 = vmatpush2.msra.mxu0 0.0
    %663 = vmatprep.subr.mxu0 0.0
    %664 = vmatpush2.msra.mxu0 0.0
    %665 = vmatprep.subr.mxu0 0.0
    %666 = vmatpush2.msra.mxu0 0.0
    %667 = vmatprep.subr.mxu0 0.0
    %668 = vmatpush2.msra.mxu0 0.0
    %669 = vmatprep.subr.mxu0 0.0
    %670 = vmatpush2.msra.mxu0 0.0
    %671 = vmatprep.subr.mxu0 0.0
    %672 = vmatpush2.msra.mxu0 0.0
    %673 = vmatprep.subr.mxu0 0.0
    %674 = vmatpush2.msra.mxu0 0.0
    %675 = vmatprep.subr.mxu0 0.0
    %676 = vmatpush2.msra.mxu0 0.0
    %677 = vmatprep.subr.mxu0 0.0
    %678 = vmatpush2.msra.mxu0 0.0
    %679 = vmatprep.subr.mxu0 0.0
    %680 = vmatpush2.msra.mxu0 0.0
    %681 = vmatprep.subr.mxu0 0.0
    %682 = vmatpush2.msra.mxu0 0.0
    %683 = vmatprep.mubr.f32.mxu0 0.0
    %684 = vmatmul.mubr.f32.gmra.mxu0 %v614
    %v685 = vpop.f32.mrf.mxu0
    %v686 = vadd.f32 0.0, %v685
    %v687 = vpop.f32.mrf.mxu0
    %688 = vdwg.mxu0
    %v689 = vadd.f32 %v618, %v686
    %v690 = vmax.f32 %v689, 0.0
    %s691 = scalar_lea.vmem [#allocation10], 40
    %692 = vst [vmem:[%s691] sm:$0xff] %v690
    %s693 = scalar_lea.vmem [#allocation3], 48
    %v694 = vld [vmem:[%s693] sm:$0xff]
    %695 = vmatprep.subr.mxu0 0.0
    %696 = vmatpush1.msra.mxu0 %v237
    %697 = vmatprep.subr.mxu0 0.0
    %698 = vmatpush1.msra.mxu0 %v236
    %699 = vmatprep.subr.mxu0 0.0
    %700 = vmatpush1.msra.mxu0 %v235
    %701 = vmatprep.subr.mxu0 0.0
    %702 = vmatpush1.msra.mxu0 %v234
    %703 = vmatprep.subr.mxu0 0.0
    %704 = vmatpush1.msra.mxu0 %v233
    %705 = vmatprep.subr.mxu0 0.0
    %706 = vmatpush1.msra.mxu0 %v232
    %707 = vmatprep.subr.mxu0 0.0
    %708 = vmatpush1.msra.mxu0 %v231
    %709 = vmatprep.subr.mxu0 0.0
    %710 = vmatpush1.msra.mxu0 %v230
    %711 = vmatprep.subr.mxu0 0.0
    %712 = vmatpush1.msra.mxu0 %v229
    %713 = vmatprep.subr.mxu0 0.0
    %714 = vmatpush1.msra.mxu0 %v228
    %715 = vmatprep.subr.mxu0 0.0
    %716 = vmatpush1.msra.mxu0 %v227
    %717 = vmatprep.subr.mxu0 0.0
    %718 = vmatpush1.msra.mxu0 %v226
    %719 = vmatprep.subr.mxu0 0.0
    %720 = vmatpush1.msra.mxu0 %v225
    %721 = vmatprep.subr.mxu0 0.0
    %722 = vmatpush1.msra.mxu0 %v224
    %723 = vmatprep.subr.mxu0 0.0
    %724 = vmatpush1.msra.mxu0 %v223
    %725 = vmatprep.subr.mxu0 0.0
    %726 = vmatpush1.msra.mxu0 %v222
    %727 = vmatprep.subr.mxu0 0.0
    %728 = vmatpush2.msra.mxu0 0.0
    %729 = vmatprep.subr.mxu0 0.0
    %730 = vmatpush2.msra.mxu0 0.0
    %731 = vmatprep.subr.mxu0 0.0
    %732 = vmatpush2.msra.mxu0 0.0
    %733 = vmatprep.subr.mxu0 0.0
    %734 = vmatpush2.msra.mxu0 0.0
    %735 = vmatprep.subr.mxu0 0.0
    %736 = vmatpush2.msra.mxu0 0.0
    %737 = vmatprep.subr.mxu0 0.0
    %738 = vmatpush2.msra.mxu0 0.0
    %739 = vmatprep.subr.mxu0 0.0
    %740 = vmatpush2.msra.mxu0 0.0
    %741 = vmatprep.subr.mxu0 0.0
    %742 = vmatpush2.msra.mxu0 0.0
    %743 = vmatprep.subr.mxu0 0.0
    %744 = vmatpush2.msra.mxu0 0.0
    %745 = vmatprep.subr.mxu0 0.0
    %746 = vmatpush2.msra.mxu0 0.0
    %747 = vmatprep.subr.mxu0 0.0
    %748 = vmatpush2.msra.mxu0 0.0
    %749 = vmatprep.subr.mxu0 0.0
    %750 = vmatpush2.msra.mxu0 0.0
    %751 = vmatprep.subr.mxu0 0.0
    %752 = vmatpush2.msra.mxu0 0.0
    %753 = vmatprep.subr.mxu0 0.0
    %754 = vmatpush2.msra.mxu0 0.0
    %755 = vmatprep.subr.mxu0 0.0
    %756 = vmatpush2.msra.mxu0 0.0
    %757 = vmatprep.subr.mxu0 0.0
    %758 = vmatpush2.msra.mxu0 0.0
    %759 = vmatprep.mubr.f32.mxu0 0.0
    %760 = vmatmul.mubr.f32.gmra.mxu0 %v690
    %v761 = vpop.f32.mrf.mxu0
    %v762 = vadd.f32 0.0, %v761
    %v763 = vpop.f32.mrf.mxu0
    %764 = vdwg.mxu0
    %v765 = vadd.f32 %v694, %v762
    %v766 = vmax.f32 %v765, 0.0
    %s767 = scalar_lea.vmem [#allocation10], 48
    %768 = vst [vmem:[%s767] sm:$0xff] %v766
    %s769 = scalar_lea.vmem [#allocation3], 56
    %v770 = vld [vmem:[%s769] sm:$0xff]
    %771 = vmatprep.subr.mxu0 0.0
    %772 = vmatpush1.msra.mxu0 %v237
    %773 = vmatprep.subr.mxu0 0.0
    %774 = vmatpush1.msra.mxu0 %v236
    %775 = vmatprep.subr.mxu0 0.0
    %776 = vmatpush1.msra.mxu0 %v235
    %777 = vmatprep.subr.mxu0 0.0
    %778 = vmatpush1.msra.mxu0 %v234
    %779 = vmatprep.subr.mxu0 0.0
    %780 = vmatpush1.msra.mxu0 %v233
    %781 = vmatprep.subr.mxu0 0.0
    %782 = vmatpush1.msra.mxu0 %v232
    %783 = vmatprep.subr.mxu0 0.0
    %784 = vmatpush1.msra.mxu0 %v231
    %785 = vmatprep.subr.mxu0 0.0
    %786 = vmatpush1.msra.mxu0 %v230
    %787 = vmatprep.subr.mxu0 0.0
    %788 = vmatpush1.msra.mxu0 %v229
    %789 = vmatprep.subr.mxu0 0.0
    %790 = vmatpush1.msra.mxu0 %v228
    %791 = vmatprep.subr.mxu0 0.0
    %792 = vmatpush1.msra.mxu0 %v227
    %793 = vmatprep.subr.mxu0 0.0
    %794 = vmatpush1.msra.mxu0 %v226
    %795 = vmatprep.subr.mxu0 0.0
    %796 = vmatpush1.msra.mxu0 %v225
    %797 = vmatprep.subr.mxu0 0.0
    %798 = vmatpush1.msra.mxu0 %v224
    %799 = vmatprep.subr.mxu0 0.0
    %800 = vmatpush1.msra.mxu0 %v223
    %801 = vmatprep.subr.mxu0 0.0
    %802 = vmatpush1.msra.mxu0 %v222
    %803 = vmatprep.subr.mxu0 0.0
    %804 = vmatpush2.msra.mxu0 0.0
    %805 = vmatprep.subr.mxu0 0.0
    %806 = vmatpush2.msra.mxu0 0.0
    %807 = vmatprep.subr.mxu0 0.0
    %808 = vmatpush2.msra.mxu0 0.0
    %809 = vmatprep.subr.mxu0 0.0
    %810 = vmatpush2.msra.mxu0 0.0
    %811 = vmatprep.subr.mxu0 0.0
    %812 = vmatpush2.msra.mxu0 0.0
    %813 = vmatprep.subr.mxu0 0.0
    %814 = vmatpush2.msra.mxu0 0.0
    %815 = vmatprep.subr.mxu0 0.0
    %816 = vmatpush2.msra.mxu0 0.0
    %817 = vmatprep.subr.mxu0 0.0
    %818 = vmatpush2.msra.mxu0 0.0
    %819 = vmatprep.subr.mxu0 0.0
    %820 = vmatpush2.msra.mxu0 0.0
    %821 = vmatprep.subr.mxu0 0.0
    %822 = vmatpush2.msra.mxu0 0.0
    %823 = vmatprep.subr.mxu0 0.0
    %824 = vmatpush2.msra.mxu0 0.0
    %825 = vmatprep.subr.mxu0 0.0
    %826 = vmatpush2.msra.mxu0 0.0
    %827 = vmatprep.subr.mxu0 0.0
    %828 = vmatpush2.msra.mxu0 0.0
    %829 = vmatprep.subr.mxu0 0.0
    %830 = vmatpush2.msra.mxu0 0.0
    %831 = vmatprep.subr.mxu0 0.0
    %832 = vmatpush2.msra.mxu0 0.0
    %833 = vmatprep.subr.mxu0 0.0
    %834 = vmatpush2.msra.mxu0 0.0
    %835 = vmatprep.mubr.f32.mxu0 0.0
    %836 = vmatmul.mubr.f32.gmra.mxu0 %v766
    %v837 = vpop.f32.mrf.mxu0
    %v838 = vadd.f32 0.0, %v837
    %v839 = vpop.f32.mrf.mxu0
    %840 = vdwg.mxu0
    %v841 = vadd.f32 %v770, %v838
    %v842 = vmax.f32 %v841, 0.0
    %s843 = scalar_lea.vmem [#allocation10], 56
    %844 = vst [vmem:[%s843] sm:$0xff] %v842
    %845 = vst [vmem:[#allocation2] sm:$0xff] %v842
    %v846 = vld [vmem:[#allocation10] sm:$0xff]
    %v847 = vld [vmem:[#allocation10 + $0x8] sm:$0xff]
    %v848 = vld [vmem:[#allocation10 + $0x10] sm:$0xff]
    %v849 = vld [vmem:[#allocation10 + $0x18] sm:$0xff]
    %v850 = vld [vmem:[#allocation10 + $0x20] sm:$0xff]
    %v851 = vld [vmem:[#allocation10 + $0x28] sm:$0xff]
    %v852 = vld [vmem:[#allocation10 + $0x30] sm:$0xff]
    %v853 = vld [vmem:[#allocation10 + $0x38] sm:$0xff]
    %v854 = vld [vmem:[#allocation7] sm:$0xff]
    %v855 = vld [vmem:[#allocation7 + $0x8] sm:$0xff]
    %v856 = vld [vmem:[#allocation7 + $0x10] sm:$0xff]
    %v857 = vld [vmem:[#allocation7 + $0x18] sm:$0xff]
    %v858 = vld [vmem:[#allocation7 + $0x20] sm:$0xff]
    %v859 = vld [vmem:[#allocation7 + $0x28] sm:$0xff]
    %v860 = vld [vmem:[#allocation7 + $0x30] sm:$0xff]
    %v861 = vld [vmem:[#allocation7 + $0x38] sm:$0xff]
    %v862 = vld [vmem:[#allocation7 + $0x40] sm:$0xff]
    %v863 = vld [vmem:[#allocation7 + $0x48] sm:$0xff]
    %v864 = vld [vmem:[#allocation7 + $0x50] sm:$0xff]
    %v865 = vld [vmem:[#allocation7 + $0x58] sm:$0xff]
    %v866 = vld [vmem:[#allocation7 + $0x60] sm:$0xff]
    %v867 = vld [vmem:[#allocation7 + $0x68] sm:$0xff]
    %v868 = vld [vmem:[#allocation7 + $0x70] sm:$0xff]
    %v869 = vld [vmem:[#allocation7 + $0x78] sm:$0xff]
    %v870 = vld [vmem:[%s6] sm:$0x1]
    %v872 = vlaneseq
    %v873 = vshrl.u32 %v872, 7
    %v874 = vsub.s32 0, %v873
    %v875 = vrot.slane %v870, %v874
    %877 = vmatprep.subr.mxu0 0.0
    %878 = vmatpush1.msra.mxu0 %v869
    %879 = vmatprep.subr.mxu0 0.0
    %880 = vmatpush1.msra.mxu0 %v868
    %881 = vmatprep.subr.mxu0 0.0
    %882 = vmatpush1.msra.mxu0 %v867
    %883 = vmatprep.subr.mxu0 0.0
    %884 = vmatpush1.msra.mxu0 %v866
    %885 = vmatprep.subr.mxu0 0.0
    %886 = vmatpush1.msra.mxu0 %v865
    %887 = vmatprep.subr.mxu0 0.0
    %888 = vmatpush1.msra.mxu0 %v864
    %889 = vmatprep.subr.mxu0 0.0
    %890 = vmatpush1.msra.mxu0 %v863
    %891 = vmatprep.subr.mxu0 0.0
    %892 = vmatpush1.msra.mxu0 %v862
    %893 = vmatprep.subr.mxu0 0.0
    %894 = vmatpush1.msra.mxu0 %v861
    %895 = vmatprep.subr.mxu0 0.0
    %896 = vmatpush1.msra.mxu0 %v860
    %897 = vmatprep.subr.mxu0 0.0
    %898 = vmatpush1.msra.mxu0 %v859
    %899 = vmatprep.subr.mxu0 0.0
    %900 = vmatpush1.msra.mxu0 %v858
    %901 = vmatprep.subr.mxu0 0.0
    %902 = vmatpush1.msra.mxu0 %v857
    %903 = vmatprep.subr.mxu0 0.0
    %904 = vmatpush1.msra.mxu0 %v856
    %905 = vmatprep.subr.mxu0 0.0
    %906 = vmatpush1.msra.mxu0 %v855
    %907 = vmatprep.subr.mxu0 0.0
    %908 = vmatpush1.msra.mxu0 %v854
    %909 = vmatprep.subr.mxu0 0.0
    %910 = vmatpush2.msra.mxu0 0.0
    %911 = vmatprep.subr.mxu0 0.0
    %912 = vmatpush2.msra.mxu0 0.0
    %913 = vmatprep.subr.mxu0 0.0
    %914 = vmatpush2.msra.mxu0 0.0
    %915 = vmatprep.subr.mxu0 0.0
    %916 = vmatpush2.msra.mxu0 0.0
    %917 = vmatprep.subr.mxu0 0.0
    %918 = vmatpush2.msra.mxu0 0.0
    %919 = vmatprep.subr.mxu0 0.0
    %920 = vmatpush2.msra.mxu0 0.0
    %921 = vmatprep.subr.mxu0 0.0
    %922 = vmatpush2.msra.mxu0 0.0
    %923 = vmatprep.subr.mxu0 0.0
    %924 = vmatpush2.msra.mxu0 0.0
    %925 = vmatprep.subr.mxu0 0.0
    %926 = vmatpush2.msra.mxu0 0.0
    %927 = vmatprep.subr.mxu0 0.0
    %928 = vmatpush2.msra.mxu0 0.0
    %929 = vmatprep.subr.mxu0 0.0
    %930 = vmatpush2.msra.mxu0 0.0
    %931 = vmatprep.subr.mxu0 0.0
    %932 = vmatpush2.msra.mxu0 0.0
    %933 = vmatprep.subr.mxu0 0.0
    %934 = vmatpush2.msra.mxu0 0.0
    %935 = vmatprep.subr.mxu0 0.0
    %936 = vmatpush2.msra.mxu0 0.0
    %937 = vmatprep.subr.mxu0 0.0
    %938 = vmatpush2.msra.mxu0 0.0
    %939 = vmatprep.subr.mxu0 0.0
    %940 = vmatpush2.msra.mxu0 0.0
    %941 = vmatprep.mubr.f32.mxu0 0.0
    %942 = vmatmul.mubr.f32.gmra.mxu0 %v846
    %v943 = vpop.f32.mrf.mxu0
    %v944 = vadd.f32 %v875, %v943
    %v945 = vpop.f32.mrf.mxu0
    %946 = vmatprep.mubr.f32.mxu0 0.0
    %947 = vmatmul.mubr.f32.gmra.mxu0 %v847
    %v948 = vpop.f32.mrf.mxu0
    %v949 = vadd.f32 %v875, %v948
    %v950 = vpop.f32.mrf.mxu0
    %951 = vmatprep.mubr.f32.mxu0 0.0
    %952 = vmatmul.mubr.f32.gmra.mxu0 %v848
    %v953 = vpop.f32.mrf.mxu0
    %v954 = vadd.f32 %v875, %v953
    %v955 = vpop.f32.mrf.mxu0
    %956 = vmatprep.mubr.f32.mxu0 0.0
    %957 = vmatmul.mubr.f32.gmra.mxu0 %v849
    %v958 = vpop.f32.mrf.mxu0
    %v959 = vadd.f32 %v875, %v958
    %v960 = vpop.f32.mrf.mxu0
    %961 = vmatprep.mubr.f32.mxu0 0.0
    %962 = vmatmul.mubr.f32.gmra.mxu0 %v850
    %v963 = vpop.f32.mrf.mxu0
    %v964 = vadd.f32 %v875, %v963
    %v965 = vpop.f32.mrf.mxu0
    %966 = vmatprep.mubr.f32.mxu0 0.0
    %967 = vmatmul.mubr.f32.gmra.mxu0 %v851
    %v968 = vpop.f32.mrf.mxu0
    %v969 = vadd.f32 %v875, %v968
    %v970 = vpop.f32.mrf.mxu0
    %971 = vmatprep.mubr.f32.mxu0 0.0
    %972 = vmatmul.mubr.f32.gmra.mxu0 %v852
    %v973 = vpop.f32.mrf.mxu0
    %v974 = vadd.f32 %v875, %v973
    %v975 = vpop.f32.mrf.mxu0
    %976 = vmatprep.mubr.f32.mxu0 0.0
    %977 = vmatmul.mubr.f32.gmra.mxu0 %v853
    %v978 = vpop.f32.mrf.mxu0
    %v979 = vadd.f32 %v875, %v978
    %v980 = vpop.f32.mrf.mxu0
    %981 = vdwg.mxu0
    %982 = vst [vmem:[#allocation9] sm:$0xff] %v944
    %983 = vst [vmem:[#allocation9 + $0x8] sm:$0xff] %v949
    %984 = vst [vmem:[#allocation9 + $0x10] sm:$0xff] %v954
    %985 = vst [vmem:[#allocation9 + $0x18] sm:$0xff] %v959
    %986 = vst [vmem:[#allocation9 + $0x20] sm:$0xff] %v964
    %987 = vst [vmem:[#allocation9 + $0x28] sm:$0xff] %v969
    %988 = vst [vmem:[#allocation9 + $0x30] sm:$0xff] %v974
    %989 = vst [vmem:[#allocation9 + $0x38] sm:$0xff] %v979
    // Predicated region
    $region42: #{tpu_custom_call.1} parent=1 // pred_check
      _
    $region43: #{tpu_custom_call.1} parent=1 // pred_check_branch
      %991 = sbr.rel (0) target = $region45
    $region44: #{tpu_custom_call.1} parent=1 // pred_region
      %s993 = ssub.s32 1024, 1024
      %994 = vsyncadd [#allocation6], %s993
      %s995 = sshll.u32 [#allocation9], 4
      %s996 = int_to_ptr.vmem [resolvable:$true] %s995
      %1001 = dma.vmem_to_hbm [thread:$0]  %s996, 1024, %s7, [#allocation6], 128, 128, 8
    $region45: #{tpu_custom_call.1} parent=1 // pred_fallthru
      _
    // Predicated region
    $region46: #{tpu_custom_call.1} parent=1 // pred_check
      _
    $region47: #{tpu_custom_call.1} parent=1 // pred_check_branch
      %1003 = sbr.rel (0) target = $region49
    $region48: #{tpu_custom_call.1} parent=1 // pred_region
      %s1005 = ssub.s32 1024, 1024
      %1006 = vsyncadd [#allocation11], %s1005
      %s1007 = sshll.u32 [#allocation10], 4
      %s1008 = int_to_ptr.vmem [resolvable:$true] %s1007
      %1013 = dma.vmem_to_hbm [thread:$0]  %s1008, 1024, %s8, [#allocation11], 128, 128, 8
    $region49: #{tpu_custom_call.1} parent=1 // pred_fallthru
      _
    // Predicated region
    $region50: #{tpu_custom_call.1} parent=1 // pred_check
      _
    $region51: #{tpu_custom_call.1} parent=1 // pred_check_branch
      %1015 = sbr.rel (0) target = $region53
    $region52: #{tpu_custom_call.1} parent=1 // pred_region
      %1016 = dma.done [#allocation6], 1024
    $region53: #{tpu_custom_call.1} parent=1 // pred_fallthru
      _
    // Predicated region
    $region54: #{tpu_custom_call.1} parent=1 // pred_check
      _
    $region55: #{tpu_custom_call.1} parent=1 // pred_check_branch
      %1018 = sbr.rel (0) target = $region57
    $region56: #{tpu_custom_call.1} parent=1 // pred_region
      %1019 = dma.done [#allocation11], 1024
    $region57: #{tpu_custom_call.1} parent=1 // pred_fallthru
      _
    %1020 = vsyncpa [#allocation5], 1
    %1021 = vsyncpa [#allocation8], 1
    %1022 = vsyncpa [#allocation6], 1
    %1023 = vsyncpa [#allocation11], 1

</llo_original>
